<compile_context>
chip_gen: v6e
topology: v6e:2x2x1
jax: 0.10.0
libtpu: 0.0.40
codegen_flags: <defaults>
</compile_context>

<pallas_src>
import numpy as np
import jax
import jax.numpy as jnp
from jax import lax
from jax.experimental import pallas as pl
from jax.experimental.pallas import tpu as pltpu

LANE = 128
MAX_TILE_N = 8192   # per-tile VMEM (~1.3 MiB incl. scratch + double-buffer) fits v7x


def _round_up(x, m):
    return ((x + m - 1) // m) * m


# --------------------------------------------------------------------------
# Pallas kernel: one LM linearization tile.
#   scal_ref (SMEM scalar-prefetch, f32[43]):
#     [0:9]   R row-major, [9:36] dR/dr_k (k-major, row-major 3x3 each),
#     [36:39] Tr, [39:41] (fx, fy), [41:43] (cx, cy)
#   pts_ref  (VMEM, f32[8, TILE]): rows x, y, z, u_obs, v_obs, mask, 0, 0
#   outputs: err (f32[2, TILE]) and the (16, 16) Gram partial of
#     D = [dpx/dparam(6); dpy/dparam(6); err_x; err_y; 0; 0] for this tile.
# --------------------------------------------------------------------------
def _lm_tile_kernel(scal_ref, pts_ref, err_ref, g_ref, d_scr):
    p0 = pts_ref[0:1, :]
    p1 = pts_ref[1:2, :]
    p2 = pts_ref[2:3, :]
    u_obs = pts_ref[3:4, :]
    v_obs = pts_ref[4:5, :]
    mask = pts_ref[5:6, :]

    fx = scal_ref[39]
    fy = scal_ref[40]
    cx = scal_ref[41]
    cy = scal_ref[42]

    # points_3d_camera = Tr + R @ p   (scalar * vector broadcasts on the VPU)
    X = scal_ref[0] * p0 + scal_ref[1] * p1 + scal_ref[2] * p2 + scal_ref[36]
    Y = scal_ref[3] * p0 + scal_ref[4] * p1 + scal_ref[5] * p2 + scal_ref[37]
    Z = scal_ref[6] * p0 + scal_ref[7] * p1 + scal_ref[8] * p2 + scal_ref[38]

    # Masked reciprocal: inv_z == 0 on padded lanes, so every Jacobian row
    # (all carry an inv_z or inv_z^2 factor) is masked for free.
    z_safe = jnp.where(mask > 0.0, Z, 1.0)
    inv_z = mask / z_safe
    inv_z2 = inv_z * inv_z

    pred_x = fx * X * inv_z + cx
    pred_y = fy * Y * inv_z + cy
    err_x = (pred_x - u_obs) * mask
    err_y = (pred_y - v_obs) * mask
    err_ref[0:1, :] = err_x
    err_ref[1:2, :] = err_y

    # Jacobian slab D (VMEM scratch only, never written back to HBM):
    #   rows 0..5  : d pred_x / d [r0, r1, r2, t0, t1, t2]
    #   rows 6..11 : d pred_y / d [r0, r1, r2, t0, t1, t2]
    #   rows 12/13 : err_x / err_y
    #   rows 14/15 : zero padding
    for k in range(3):                          # rotation (Rodrigues) parameters
        b = 9 + 9 * k
        dX = scal_ref[b + 0] * p0 + scal_ref[b + 1] * p1 + scal_ref[b + 2] * p2
        dY = scal_ref[b + 3] * p0 + scal_ref[b + 4] * p1 + scal_ref[b + 5] * p2
        dZ = scal_ref[b + 6] * p0 + scal_ref[b + 7] * p1 + scal_ref[b + 8] * p2
        d_scr[k:k + 1, :] = fx * (dX * inv_z - X * dZ * inv_z2)
        d_scr[6 + k:7 + k, :] = fy * (dY * inv_z - Y * dZ * inv_z2)

    zero = jnp.zeros_like(inv_z)                # translation parameters
    d_scr[3:4, :] = fx * inv_z
    d_scr[4:5, :] = zero
    d_scr[5:6, :] = -fx * X * inv_z2
    d_scr[9:10, :] = zero
    d_scr[10:11, :] = fy * inv_z
    d_scr[11:12, :] = -fy * Y * inv_z2
    d_scr[12:13, :] = err_x
    d_scr[13:14, :] = err_y
    d_scr[14:16, :] = jnp.zeros((2, d_scr.shape[1]), jnp.float32)

    # One transpose-free Gram contraction on the MXU:
    #   G[i, j] = sum_n D[i, n] * D[j, n]
    D = d_scr[...]
    G = lax.dot_general(D, D, (((1,), (1,)), ((), ())),
                        preferred_element_type=jnp.float32)
    g_ref[0, :, :] = G


def make_lm_step(npad, tile_n):
    assert npad % tile_n == 0 and tile_n % LANE == 0
    num_tiles = npad // tile_n
    grid_spec = pltpu.PrefetchScalarGridSpec(
        num_scalar_prefetch=1,
        grid=(num_tiles,),
        in_specs=[pl.BlockSpec((8, tile_n), lambda i, scal: (0, i))],
        out_specs=(pl.BlockSpec((2, tile_n), lambda i, scal: (0, i)),
                   pl.BlockSpec((1, 16, 16), lambda i, scal: (i, 0, 0))),
        scratch_shapes=[pltpu.VMEM((16, tile_n), jnp.float32)],
    )
    return pl.pallas_call(
        _lm_tile_kernel,
        out_shape=(jax.ShapeDtypeStruct((2, npad), jnp.float32),      # residuals
                   jax.ShapeDtypeStruct((num_tiles, 16, 16), jnp.float32)),  # Gram partials
        grid_spec=grid_spec,
        compiler_params=pltpu.CompilerParams(
            dimension_semantics=("parallel",)),
    )


# --------------------------------------------------------------------------
# Glue: Rodrigues map (+ exact forward-mode derivative) and the LM loop.
# --------------------------------------------------------------------------
def rodrigues_to_matrix(r):
    r = jnp.asarray(r, jnp.float32)
    theta = jnp.sqrt(jnp.sum(r * r))
    small = theta < 1e-8
    theta_safe = jnp.where(small, 1.0, theta)
    u = r / theta_safe
    zero = jnp.zeros((), jnp.float32)

    def skew(v):
        return jnp.stack([jnp.stack([zero, -v[2], v[1]]),
                          jnp.stack([v[2], zero, -v[0]]),
                          jnp.stack([-v[1], v[0], zero])])

    c = jnp.cos(theta)
    s = jnp.sin(theta)
    eye = jnp.eye(3, dtype=jnp.float32)
    r_full = eye * c + (1.0 - c) * jnp.outer(u, u) + skew(u) * s
    r_small = eye + skew(r)   # theta -> 0 limit (the PyTorch ref would NaN here)
    return jnp.where(small, r_small, r_full)


def _full_jacobian(rodr, tr, points3d, focals, centers):
    """Dense (2N, 6) Jacobian (row order x0, y0, x1, y1, ...). Debug path only."""
    points3d = jnp.asarray(points3d, jnp.float32)
    focals = jnp.asarray(focals, jnp.float32)
    centers = jnp.asarray(centers, jnp.float32)

    def proj_flat(params):
        R = rodrigues_to_matrix(params[:3])
        p_cam = points3d @ R.T + params[3:]
        pred = focals * p_cam[:, :2] / p_cam[:, 2:3] + centers
        return pred.reshape(-1)

    params = jnp.concatenate([jnp.asarray(rodr, jnp.float32),
                              jnp.asarray(tr, jnp.float32)])
    return jax.jacfwd(proj_flat)(params)


def cpc_r_forward(points3d, points2d, initial_rodrigues, initial_tr,
                  policy_iterations, policy_lambda, focals, centers,
                  tile_n=None, materialize_jacobian=False):
    n_points = int(points3d.shape[0])
    n_round = _round_up(max(n_points, 1), LANE)
    if tile_n is None:
        tile_n = min(MAX_TILE_N, n_round)
    npad = _round_up(max(n_points, 1), tile_n)

    points3d = jnp.asarray(points3d, jnp.float32)
    points2d = jnp.asarray(points2d, jnp.float32)
    focals = jnp.asarray(focals, jnp.float32)
    centers = jnp.asarray(centers, jnp.float32)
    rodr = jnp.asarray(initial_rodrigues, jnp.float32)
    tr = jnp.asarray(initial_tr, jnp.float32)

    # Pack x, y, z, u, v, mask into one 8-sublane slab -> one DMA per tile.
    pts = jnp.zeros((8, npad), jnp.float32)
    pts = pts.at[0:3, :n_points].set(points3d.T)
    pts = pts.at[3:5, :n_points].set(points2d.T)
    pts = pts.at[5, :n_points].set(1.0)

    lm_step = make_lm_step(npad, tile_n)

    @jax.jit
    def lm_iteration(pts_slab, rodr, tr, lam):
        # Rodrigues map + the exact forward-mode derivative of the same
        # expression the PyTorch autograd differentiates.
        R = rodrigues_to_matrix(rodr)
        dR = jnp.transpose(jax.jacfwd(rodrigues_to_matrix)(rodr),
                           (2, 0, 1)).reshape(27)
        scal = jnp.concatenate([R.reshape(9), dR, tr, focals, centers])

        err_pad, g_tiles = lm_step(scal, pts_slab)
        G = jnp.sum(g_tiles, axis=0)                       # (16, 16)
        jtj = G[0:6, 0:6] + G[6:12, 6:12]                  # J^T J
        jte = G[0:6, 12] + G[6:12, 13]                     # J^T e

        jtj_sum = jnp.sum(jtj)                             # PyTorch degeneracy test
        lam_used = jnp.where(lam < 0.0, 1e-8 * jnp.max(jnp.diag(jtj)), lam)
        A = jtj + lam_used * jnp.eye(6, dtype=jnp.float32)
        updates = -jnp.linalg.solve(A, jte)
        finite = jnp.all(jnp.isfinite(updates)).astype(jnp.float32)

        error = err_pad[:, :n_points].T                    # (N, 2) = pred - observed
        scalars = jnp.stack([jtj_sum, lam_used, finite])
        return error, updates, rodr + updates[:3], tr + updates[3:], scalars

    prev_error = None
    cur_error = None
    error = None
    updates = None
    jac = None
    lam = None
    factor = 2
    iteration = 0

    # TODO(synk): the data-dependent while-loop driven by arbitrary Python
    # policy callables stays host-side (as in the PyTorch module); all device
    # work per iteration is a single jitted dispatch + a tiny host readback.
    while policy_iterations(
            iteration, prev_error, cur_error, jac, error, updates,
            [float(v) for v in np.asarray(rodr)] + [float(v) for v in np.asarray(tr)]):
        error, updates, new_rodr, new_tr, scalars = lm_iteration(
            pts, rodr, tr, -1.0 if lam is None else float(lam))
        jtj_sum, lam_used, finite = (float(s) for s in np.asarray(scalars))

        if materialize_jacobian:
            # Debug-only path: the kernel no longer emits the per-point Jacobian.
            jac = _full_jacobian(rodr, tr, points3d, focals, centers)

        if jtj_sum < 1e-7:   # NOTE: mirrors PyTorch's `jac_dot.sum() < 1e-7` test
            break
        lam = lam_used
        if finite < 0.5:     # singular / non-finite solve -> bail like torch.inverse
            break

        rodr, tr = new_rodr, new_tr
        prev_error = cur_error
        cur_error = error
        iteration += 1
        lam, factor = policy_lambda(lam, factor, prev_error, cur_error, jac, updates)

    mse = float(jnp.mean(error ** 2)) if error is not None else None
    return rodr, tr, mse


# --------------------------------------------------------------------------
# Demo / sanity checks
# --------------------------------------------------------------------------
if __name__ == "__main__":
    key = jax.random.PRNGKey(0)
    k1, k2 = jax.random.split(key)

    n_points = 8
    focals = jnp.array([500.0, 500.0], jnp.float32)
    centers = jnp.array([320.0, 240.0], jnp.float32)

    # deterministic synthetic scene
    points3d = jax.random.uniform(k1, (n_points, 3), jnp.float32, -1.0, 1.0)
    gt_rodr = jnp.array([0.20, -0.10, 0.15], jnp.float32)
    gt_tr = jnp.array([0.10, -0.20, 4.00], jnp.float32)
    R_gt = rodrigues_to_matrix(gt_rodr)
    p_cam_gt = points3d @ R_gt.T + gt_tr
    points2d = focals * p_cam_gt[:, :2] / p_cam_gt[:, 2:3] + centers

    initial_rodrigues = jnp.array([0.15, -0.05, 0.10], jnp.float32)
    initial_tr = jnp.array([0.00, 0.00, 3.50], jnp.float32)

    # ---- single-tile kernel check against a pure-JAX reference ----
    npad = LANE
    pts = jnp.zeros((8, npad), jnp.float32)
    pts = pts.at[0:3, :n_points].set(points3d.T)
    pts = pts.at[3:5, :n_points].set(points2d.T)
    pts = pts.at[5, :n_points].set(1.0)

    R0 = rodrigues_to_matrix(initial_rodrigues)
    dR0 = jnp.transpose(jax.jacfwd(rodrigues_to_matrix)(initial_rodrigues),
                        (2, 0, 1)).reshape(27)
    scal = jnp.concatenate([R0.reshape(9), dR0, initial_tr, focals, centers])
    err_pad, g_tiles = make_lm_step(npad, LANE)(scal, pts)
    jax.block_until_ready((err_pad, g_tiles))

    G = jnp.sum(g_tiles, axis=0)
    jtj_k = G[0:6, 0:6] + G[6:12, 6:12]
    jte_k = G[0:6, 12] + G[6:12, 13]

    p_cam_ref = points3d @ R0.T + initial_tr
    pred_ref = focals * p_cam_ref[:, :2] / p_cam_ref[:, 2:3] + centers
    err_ref = pred_ref - points2d
    J_ref = _full_jacobian(initial_rodrigues, initial_tr, points3d, focals, centers)
    jtj_ref = J_ref.T @ J_ref
    jte_ref = J_ref.T @ err_ref.reshape(-1)

    np.testing.assert_allclose(np.asarray(err_pad[:, :n_points].T),
                               np.asarray(err_ref), rtol=1e-3, atol=1e-2)
    np.testing.assert_allclose(np.asarray(jtj_k), np.asarray(jtj_ref),
                               rtol=2e-3, atol=1.0)
    np.testing.assert_allclose(np.asarray(jte_k), np.asarray(jte_ref),
                               rtol=2e-3, atol=1.0)

    # ---- full LM forward, mirroring CPC_R.forward ----
    def policy_iterations(iteration, prev_error, cur_error, jac, error, updates, params):
        return iteration < 10

    def policy_lambda(lam, factor, prev_error, cur_error, jac, updates):
        return lam, factor

    rt, tr_out, mse = cpc_r_forward(points3d, points2d, initial_rodrigues, initial_tr,
                                    policy_iterations, policy_lambda, focals, centers)
    jax.block_until_ready((rt, tr_out))
    assert mse is not None and np.isfinite(mse) and mse < 1.0

    # ---- multi-tile grid path (several point tiles, "parallel" grid axis) ----
    n2 = 300
    pts3d_2 = jax.random.uniform(k2, (n2, 3), jnp.float32, -1.0, 1.0)
    p_cam2 = pts3d_2 @ R_gt.T + gt_tr
    pts2d_2 = focals * p_cam2[:, :2] / p_cam2[:, 2:3] + centers
    rt2, tr2, mse2 = cpc_r_forward(pts3d_2, pts2d_2, initial_rodrigues, initial_tr,
                                   policy_iterations, policy_lambda, focals, centers,
                                   tile_n=LANE)
    jax.block_until_ready((rt2, tr2))
    assert mse2 is not None and np.isfinite(mse2) and mse2 < 1.0

    print("KERNEL_OK")
</pallas_src>

<mosaic_0001>
module attributes {stable_mosaic.version = 11 : i64} {
  func.func @_lm_tile_kernel(%arg0: i32, %arg1: memref<43xf32, #tpu.memory_space<smem>>, %arg2: memref<8x128xf32, #tpu.memory_space<vmem>>, %arg3: memref<2x128xf32, #tpu.memory_space<vmem>>, %arg4: memref<1x16x16xf32, #tpu.memory_space<vmem>>, %arg5: memref<16x128xf32, #tpu.memory_space<vmem>>) attributes {dimension_semantics = [#tpu.dimension_semantics<parallel>], iteration_bounds = array<i64: 1>, scalar_prefetch = 1 : i64, scratch_operands = 1 : i64, tpu.core_type = #tpu.core_type<tc>, window_params = [{transform_indices = @transform_0, window_bounds = array<i64: 8, 128>}, {transform_indices = @transform_1, window_bounds = array<i64: 2, 128>}, {transform_indices = @transform_2, window_bounds = array<i64: 1, 16, 16>}]} {
    %c0 = arith.constant 0 : index
    %c0_0 = arith.constant 0 : index
    %0 = vector.load %arg2[%c0, %c0_0] : memref<8x128xf32, #tpu.memory_space<vmem>>, vector<1x128xf32>
    %c1 = arith.constant 1 : index
    %c0_1 = arith.constant 0 : index
    %1 = vector.load %arg2[%c1, %c0_1] : memref<8x128xf32, #tpu.memory_space<vmem>>, vector<1x128xf32>
    %c2 = arith.constant 2 : index
    %c0_2 = arith.constant 0 : index
    %2 = vector.load %arg2[%c2, %c0_2] : memref<8x128xf32, #tpu.memory_space<vmem>>, vector<1x128xf32>
    %c3 = arith.constant 3 : index
    %c0_3 = arith.constant 0 : index
    %3 = vector.load %arg2[%c3, %c0_3] : memref<8x128xf32, #tpu.memory_space<vmem>>, vector<1x128xf32>
    %c4 = arith.constant 4 : index
    %c0_4 = arith.constant 0 : index
    %4 = vector.load %arg2[%c4, %c0_4] : memref<8x128xf32, #tpu.memory_space<vmem>>, vector<1x128xf32>
    %c5 = arith.constant 5 : index
    %c0_5 = arith.constant 0 : index
    %5 = vector.load %arg2[%c5, %c0_5] : memref<8x128xf32, #tpu.memory_space<vmem>>, vector<1x128xf32>
    %c39 = arith.constant 39 : index
    %6 = memref.load %arg1[%c39] : memref<43xf32, #tpu.memory_space<smem>>
    %c40 = arith.constant 40 : index
    %7 = memref.load %arg1[%c40] : memref<43xf32, #tpu.memory_space<smem>>
    %c41 = arith.constant 41 : index
    %8 = memref.load %arg1[%c41] : memref<43xf32, #tpu.memory_space<smem>>
    %c42 = arith.constant 42 : index
    %9 = memref.load %arg1[%c42] : memref<43xf32, #tpu.memory_space<smem>>
    %c0_6 = arith.constant 0 : index
    %10 = memref.load %arg1[%c0_6] : memref<43xf32, #tpu.memory_space<smem>>
    %11 = vector.broadcast %10 : f32 to vector<1x128xf32>
    %12 = arith.mulf %11, %0 : vector<1x128xf32>
    %c1_7 = arith.constant 1 : index
    %13 = memref.load %arg1[%c1_7] : memref<43xf32, #tpu.memory_space<smem>>
    %14 = vector.broadcast %13 : f32 to vector<1x128xf32>
    %15 = arith.mulf %14, %1 : vector<1x128xf32>
    %16 = arith.addf %12, %15 : vector<1x128xf32>
    %c2_8 = arith.constant 2 : index
    %17 = memref.load %arg1[%c2_8] : memref<43xf32, #tpu.memory_space<smem>>
    %18 = vector.broadcast %17 : f32 to vector<1x128xf32>
    %19 = arith.mulf %18, %2 : vector<1x128xf32>
    %20 = arith.addf %16, %19 : vector<1x128xf32>
    %c36 = arith.constant 36 : index
    %21 = memref.load %arg1[%c36] : memref<43xf32, #tpu.memory_space<smem>>
    %22 = vector.broadcast %21 : f32 to vector<1x128xf32>
    %23 = arith.addf %20, %22 : vector<1x128xf32>
    %c3_9 = arith.constant 3 : index
    %24 = memref.load %arg1[%c3_9] : memref<43xf32, #tpu.memory_space<smem>>
    %25 = vector.broadcast %24 : f32 to vector<1x128xf32>
    %26 = arith.mulf %25, %0 : vector<1x128xf32>
    %c4_10 = arith.constant 4 : index
    %27 = memref.load %arg1[%c4_10] : memref<43xf32, #tpu.memory_space<smem>>
    %28 = vector.broadcast %27 : f32 to vector<1x128xf32>
    %29 = arith.mulf %28, %1 : vector<1x128xf32>
    %30 = arith.addf %26, %29 : vector<1x128xf32>
    %c5_11 = arith.constant 5 : index
    %31 = memref.load %arg1[%c5_11] : memref<43xf32, #tpu.memory_space<smem>>
    %32 = vector.broadcast %31 : f32 to vector<1x128xf32>
    %33 = arith.mulf %32, %2 : vector<1x128xf32>
    %34 = arith.addf %30, %33 : vector<1x128xf32>
    %c37 = arith.constant 37 : index
    %35 = memref.load %arg1[%c37] : memref<43xf32, #tpu.memory_space<smem>>
    %36 = vector.broadcast %35 : f32 to vector<1x128xf32>
    %37 = arith.addf %34, %36 : vector<1x128xf32>
    %c6 = arith.constant 6 : index
    %38 = memref.load %arg1[%c6] : memref<43xf32, #tpu.memory_space<smem>>
    %39 = vector.broadcast %38 : f32 to vector<1x128xf32>
    %40 = arith.mulf %39, %0 : vector<1x128xf32>
    %c7 = arith.constant 7 : index
    %41 = memref.load %arg1[%c7] : memref<43xf32, #tpu.memory_space<smem>>
    %42 = vector.broadcast %41 : f32 to vector<1x128xf32>
    %43 = arith.mulf %42, %1 : vector<1x128xf32>
    %44 = arith.addf %40, %43 : vector<1x128xf32>
    %c8 = arith.constant 8 : index
    %45 = memref.load %arg1[%c8] : memref<43xf32, #tpu.memory_space<smem>>
    %46 = vector.broadcast %45 : f32 to vector<1x128xf32>
    %47 = arith.mulf %46, %2 : vector<1x128xf32>
    %48 = arith.addf %44, %47 : vector<1x128xf32>
    %c38 = arith.constant 38 : index
    %49 = memref.load %arg1[%c38] : memref<43xf32, #tpu.memory_space<smem>>
    %50 = vector.broadcast %49 : f32 to vector<1x128xf32>
    %51 = arith.addf %48, %50 : vector<1x128xf32>
    %cst = arith.constant 0.000000e+00 : f32
    %52 = vector.broadcast %cst : f32 to vector<1x128xf32>
    %53 = arith.cmpf ogt, %5, %52 : vector<1x128xf32>
    %cst_12 = arith.constant 1.000000e+00 : f32
    %54 = vector.broadcast %cst_12 : f32 to vector<1x128xf32>
    %55 = arith.select %53, %51, %54 : vector<1x128xi1>, vector<1x128xf32>
    %56 = arith.divf %5, %55 : vector<1x128xf32>
    %57 = arith.mulf %56, %56 : vector<1x128xf32>
    %58 = vector.broadcast %6 : f32 to vector<1x128xf32>
    %59 = arith.mulf %58, %23 : vector<1x128xf32>
    %60 = arith.mulf %59, %56 : vector<1x128xf32>
    %61 = vector.broadcast %8 : f32 to vector<1x128xf32>
    %62 = arith.addf %60, %61 : vector<1x128xf32>
    %63 = vector.broadcast %7 : f32 to vector<1x128xf32>
    %64 = arith.mulf %63, %37 : vector<1x128xf32>
    %65 = arith.mulf %64, %56 : vector<1x128xf32>
    %66 = vector.broadcast %9 : f32 to vector<1x128xf32>
    %67 = arith.addf %65, %66 : vector<1x128xf32>
    %68 = arith.subf %62, %3 : vector<1x128xf32>
    %69 = arith.mulf %68, %5 : vector<1x128xf32>
    %70 = arith.subf %67, %4 : vector<1x128xf32>
    %71 = arith.mulf %70, %5 : vector<1x128xf32>
    %c0_13 = arith.constant 0 : index
    %c0_14 = arith.constant 0 : index
    %72 = vector.load %arg3[%c0_13, %c0_14] : memref<2x128xf32, #tpu.memory_space<vmem>>, vector<1x128xf32>
    tpu.vector_store %arg3[%c0_13, %c0_14], %69 {strides = array<i32>} : memref<2x128xf32, #tpu.memory_space<vmem>>, vector<1x128xf32>,
    %c1_15 = arith.constant 1 : index
    %c0_16 = arith.constant 0 : index
    %73 = vector.load %arg3[%c1_15, %c0_16] : memref<2x128xf32, #tpu.memory_space<vmem>>, vector<1x128xf32>
    tpu.vector_store %arg3[%c1_15, %c0_16], %71 {strides = array<i32>} : memref<2x128xf32, #tpu.memory_space<vmem>>, vector<1x128xf32>,
    %c9 = arith.constant 9 : index
    %74 = memref.load %arg1[%c9] : memref<43xf32, #tpu.memory_space<smem>>
    %75 = vector.broadcast %74 : f32 to vector<1x128xf32>
    %76 = arith.mulf %75, %0 : vector<1x128xf32>
    %c10 = arith.constant 10 : index
    %77 = memref.load %arg1[%c10] : memref<43xf32, #tpu.memory_space<smem>>
    %78 = vector.broadcast %77 : f32 to vector<1x128xf32>
    %79 = arith.mulf %78, %1 : vector<1x128xf32>
    %80 = arith.addf %76, %79 : vector<1x128xf32>
    %c11 = arith.constant 11 : index
    %81 = memref.load %arg1[%c11] : memref<43xf32, #tpu.memory_space<smem>>
    %82 = vector.broadcast %81 : f32 to vector<1x128xf32>
    %83 = arith.mulf %82, %2 : vector<1x128xf32>
    %84 = arith.addf %80, %83 : vector<1x128xf32>
    %c12 = arith.constant 12 : index
    %85 = memref.load %arg1[%c12] : memref<43xf32, #tpu.memory_space<smem>>
    %86 = vector.broadcast %85 : f32 to vector<1x128xf32>
    %87 = arith.mulf %86, %0 : vector<1x128xf32>
    %c13 = arith.constant 13 : index
    %88 = memref.load %arg1[%c13] : memref<43xf32, #tpu.memory_space<smem>>
    %89 = vector.broadcast %88 : f32 to vector<1x128xf32>
    %90 = arith.mulf %89, %1 : vector<1x128xf32>
    %91 = arith.addf %87, %90 : vector<1x128xf32>
    %c14 = arith.constant 14 : index
    %92 = memref.load %arg1[%c14] : memref<43xf32, #tpu.memory_space<smem>>
    %93 = vector.broadcast %92 : f32 to vector<1x128xf32>
    %94 = arith.mulf %93, %2 : vector<1x128xf32>
    %95 = arith.addf %91, %94 : vector<1x128xf32>
    %c15 = arith.constant 15 : index
    %96 = memref.load %arg1[%c15] : memref<43xf32, #tpu.memory_space<smem>>
    %97 = vector.broadcast %96 : f32 to vector<1x128xf32>
    %98 = arith.mulf %97, %0 : vector<1x128xf32>
    %c16 = arith.constant 16 : index
    %99 = memref.load %arg1[%c16] : memref<43xf32, #tpu.memory_space<smem>>
    %100 = vector.broadcast %99 : f32 to vector<1x128xf32>
    %101 = arith.mulf %100, %1 : vector<1x128xf32>
    %102 = arith.addf %98, %101 : vector<1x128xf32>
    %c17 = arith.constant 17 : index
    %103 = memref.load %arg1[%c17] : memref<43xf32, #tpu.memory_space<smem>>
    %104 = vector.broadcast %103 : f32 to vector<1x128xf32>
    %105 = arith.mulf %104, %2 : vector<1x128xf32>
    %106 = arith.addf %102, %105 : vector<1x128xf32>
    %107 = arith.mulf %84, %56 : vector<1x128xf32>
    %108 = arith.mulf %23, %106 : vector<1x128xf32>
    %109 = arith.mulf %108, %57 : vector<1x128xf32>
    %110 = arith.subf %107, %109 : vector<1x128xf32>
    %111 = vector.broadcast %6 : f32 to vector<1x128xf32>
    %112 = arith.mulf %111, %110 : vector<1x128xf32>
    %c0_17 = arith.constant 0 : index
    %c0_18 = arith.constant 0 : index
    %113 = vector.load %arg5[%c0_17, %c0_18] : memref<16x128xf32, #tpu.memory_space<vmem>>, vector<1x128xf32>
    tpu.vector_store %arg5[%c0_17, %c0_18], %112 {strides = array<i32>} : memref<16x128xf32, #tpu.memory_space<vmem>>, vector<1x128xf32>,
    %114 = arith.mulf %95, %56 : vector<1x128xf32>
    %115 = arith.mulf %37, %106 : vector<1x128xf32>
    %116 = arith.mulf %115, %57 : vector<1x128xf32>
    %117 = arith.subf %114, %116 : vector<1x128xf32>
    %118 = vector.broadcast %7 : f32 to vector<1x128xf32>
    %119 = arith.mulf %118, %117 : vector<1x128xf32>
    %c6_19 = arith.constant 6 : index
    %c0_20 = arith.constant 0 : index
    %120 = vector.load %arg5[%c6_19, %c0_20] : memref<16x128xf32, #tpu.memory_space<vmem>>, vector<1x128xf32>
    tpu.vector_store %arg5[%c6_19, %c0_20], %119 {strides = array<i32>} : memref<16x128xf32, #tpu.memory_space<vmem>>, vector<1x128xf32>,
    %c18 = arith.constant 18 : index
    %121 = memref.load %arg1[%c18] : memref<43xf32, #tpu.memory_space<smem>>
    %122 = vector.broadcast %121 : f32 to vector<1x128xf32>
    %123 = arith.mulf %122, %0 : vector<1x128xf32>
    %c19 = arith.constant 19 : index
    %124 = memref.load %arg1[%c19] : memref<43xf32, #tpu.memory_space<smem>>
    %125 = vector.broadcast %124 : f32 to vector<1x128xf32>
    %126 = arith.mulf %125, %1 : vector<1x128xf32>
    %127 = arith.addf %123, %126 : vector<1x128xf32>
    %c20 = arith.constant 20 : index
    %128 = memref.load %arg1[%c20] : memref<43xf32, #tpu.memory_space<smem>>
    %129 = vector.broadcast %128 : f32 to vector<1x128xf32>
    %130 = arith.mulf %129, %2 : vector<1x128xf32>
    %131 = arith.addf %127, %130 : vector<1x128xf32>
    %c21 = arith.constant 21 : index
    %132 = memref.load %arg1[%c21] : memref<43xf32, #tpu.memory_space<smem>>
    %133 = vector.broadcast %132 : f32 to vector<1x128xf32>
    %134 = arith.mulf %133, %0 : vector<1x128xf32>
    %c22 = arith.constant 22 : index
    %135 = memref.load %arg1[%c22] : memref<43xf32, #tpu.memory_space<smem>>
    %136 = vector.broadcast %135 : f32 to vector<1x128xf32>
    %137 = arith.mulf %136, %1 : vector<1x128xf32>
    %138 = arith.addf %134, %137 : vector<1x128xf32>
    %c23 = arith.constant 23 : index
    %139 = memref.load %arg1[%c23] : memref<43xf32, #tpu.memory_space<smem>>
    %140 = vector.broadcast %139 : f32 to vector<1x128xf32>
    %141 = arith.mulf %140, %2 : vector<1x128xf32>
    %142 = arith.addf %138, %141 : vector<1x128xf32>
    %c24 = arith.constant 24 : index
    %143 = memref.load %arg1[%c24] : memref<43xf32, #tpu.memory_space<smem>>
    %144 = vector.broadcast %143 : f32 to vector<1x128xf32>
    %145 = arith.mulf %144, %0 : vector<1x128xf32>
    %c25 = arith.constant 25 : index
    %146 = memref.load %arg1[%c25] : memref<43xf32, #tpu.memory_space<smem>>
    %147 = vector.broadcast %146 : f32 to vector<1x128xf32>
    %148 = arith.mulf %147, %1 : vector<1x128xf32>
    %149 = arith.addf %145, %148 : vector<1x128xf32>
    %c26 = arith.constant 26 : index
    %150 = memref.load %arg1[%c26] : memref<43xf32, #tpu.memory_space<smem>>
    %151 = vector.broadcast %150 : f32 to vector<1x128xf32>
    %152 = arith.mulf %151, %2 : vector<1x128xf32>
    %153 = arith.addf %149, %152 : vector<1x128xf32>
    %154 = arith.mulf %131, %56 : vector<1x128xf32>
    %155 = arith.mulf %23, %153 : vector<1x128xf32>
    %156 = arith.mulf %155, %57 : vector<1x128xf32>
    %157 = arith.subf %154, %156 : vector<1x128xf32>
    %158 = vector.broadcast %6 : f32 to vector<1x128xf32>
    %159 = arith.mulf %158, %157 : vector<1x128xf32>
    %c1_21 = arith.constant 1 : index
    %c0_22 = arith.constant 0 : index
    %160 = vector.load %arg5[%c1_21, %c0_22] : memref<16x128xf32, #tpu.memory_space<vmem>>, vector<1x128xf32>
    tpu.vector_store %arg5[%c1_21, %c0_22], %159 {strides = array<i32>} : memref<16x128xf32, #tpu.memory_space<vmem>>, vector<1x128xf32>,
    %161 = arith.mulf %142, %56 : vector<1x128xf32>
    %162 = arith.mulf %37, %153 : vector<1x128xf32>
    %163 = arith.mulf %162, %57 : vector<1x128xf32>
    %164 = arith.subf %161, %163 : vector<1x128xf32>
    %165 = vector.broadcast %7 : f32 to vector<1x128xf32>
    %166 = arith.mulf %165, %164 : vector<1x128xf32>
    %c7_23 = arith.constant 7 : index
    %c0_24 = arith.constant 0 : index
    %167 = vector.load %arg5[%c7_23, %c0_24] : memref<16x128xf32, #tpu.memory_space<vmem>>, vector<1x128xf32>
    tpu.vector_store %arg5[%c7_23, %c0_24], %166 {strides = array<i32>} : memref<16x128xf32, #tpu.memory_space<vmem>>, vector<1x128xf32>,
    %c27 = arith.constant 27 : index
    %168 = memref.load %arg1[%c27] : memref<43xf32, #tpu.memory_space<smem>>
    %169 = vector.broadcast %168 : f32 to vector<1x128xf32>
    %170 = arith.mulf %169, %0 : vector<1x128xf32>
    %c28 = arith.constant 28 : index
    %171 = memref.load %arg1[%c28] : memref<43xf32, #tpu.memory_space<smem>>
    %172 = vector.broadcast %171 : f32 to vector<1x128xf32>
    %173 = arith.mulf %172, %1 : vector<1x128xf32>
    %174 = arith.addf %170, %173 : vector<1x128xf32>
    %c29 = arith.constant 29 : index
    %175 = memref.load %arg1[%c29] : memref<43xf32, #tpu.memory_space<smem>>
    %176 = vector.broadcast %175 : f32 to vector<1x128xf32>
    %177 = arith.mulf %176, %2 : vector<1x128xf32>
    %178 = arith.addf %174, %177 : vector<1x128xf32>
    %c30 = arith.constant 30 : index
    %179 = memref.load %arg1[%c30] : memref<43xf32, #tpu.memory_space<smem>>
    %180 = vector.broadcast %179 : f32 to vector<1x128xf32>
    %181 = arith.mulf %180, %0 : vector<1x128xf32>
    %c31 = arith.constant 31 : index
    %182 = memref.load %arg1[%c31] : memref<43xf32, #tpu.memory_space<smem>>
    %183 = vector.broadcast %182 : f32 to vector<1x128xf32>
    %184 = arith.mulf %183, %1 : vector<1x128xf32>
    %185 = arith.addf %181, %184 : vector<1x128xf32>
    %c32 = arith.constant 32 : index
    %186 = memref.load %arg1[%c32] : memref<43xf32, #tpu.memory_space<smem>>
    %187 = vector.broadcast %186 : f32 to vector<1x128xf32>
    %188 = arith.mulf %187, %2 : vector<1x128xf32>
    %189 = arith.addf %185, %188 : vector<1x128xf32>
    %c33 = arith.constant 33 : index
    %190 = memref.load %arg1[%c33] : memref<43xf32, #tpu.memory_space<smem>>
    %191 = vector.broadcast %190 : f32 to vector<1x128xf32>
    %192 = arith.mulf %191, %0 : vector<1x128xf32>
    %c34 = arith.constant 34 : index
    %193 = memref.load %arg1[%c34] : memref<43xf32, #tpu.memory_space<smem>>
    %194 = vector.broadcast %193 : f32 to vector<1x128xf32>
    %195 = arith.mulf %194, %1 : vector<1x128xf32>
    %196 = arith.addf %192, %195 : vector<1x128xf32>
    %c35 = arith.constant 35 : index
    %197 = memref.load %arg1[%c35] : memref<43xf32, #tpu.memory_space<smem>>
    %198 = vector.broadcast %197 : f32 to vector<1x128xf32>
    %199 = arith.mulf %198, %2 : vector<1x128xf32>
    %200 = arith.addf %196, %199 : vector<1x128xf32>
    %201 = arith.mulf %178, %56 : vector<1x128xf32>
    %202 = arith.mulf %23, %200 : vector<1x128xf32>
    %203 = arith.mulf %202, %57 : vector<1x128xf32>
    %204 = arith.subf %201, %203 : vector<1x128xf32>
    %205 = vector.broadcast %6 : f32 to vector<1x128xf32>
    %206 = arith.mulf %205, %204 : vector<1x128xf32>
    %c2_25 = arith.constant 2 : index
    %c0_26 = arith.constant 0 : index
    %207 = vector.load %arg5[%c2_25, %c0_26] : memref<16x128xf32, #tpu.memory_space<vmem>>, vector<1x128xf32>
    tpu.vector_store %arg5[%c2_25, %c0_26], %206 {strides = array<i32>} : memref<16x128xf32, #tpu.memory_space<vmem>>, vector<1x128xf32>,
    %208 = arith.mulf %189, %56 : vector<1x128xf32>
    %209 = arith.mulf %37, %200 : vector<1x128xf32>
    %210 = arith.mulf %209, %57 : vector<1x128xf32>
    %211 = arith.subf %208, %210 : vector<1x128xf32>
    %212 = vector.broadcast %7 : f32 to vector<1x128xf32>
    %213 = arith.mulf %212, %211 : vector<1x128xf32>
    %c8_27 = arith.constant 8 : index
    %c0_28 = arith.constant 0 : index
    %214 = vector.load %arg5[%c8_27, %c0_28] : memref<16x128xf32, #tpu.memory_space<vmem>>, vector<1x128xf32>
    tpu.vector_store %arg5[%c8_27, %c0_28], %213 {strides = array<i32>} : memref<16x128xf32, #tpu.memory_space<vmem>>, vector<1x128xf32>,
    %cst_29 = arith.constant 0.000000e+00 : f32
    %215 = vector.broadcast %cst_29 : f32 to vector<1x128xf32>
    %216 = vector.broadcast %6 : f32 to vector<1x128xf32>
    %217 = arith.mulf %216, %56 : vector<1x128xf32>
    %c3_30 = arith.constant 3 : index
    %c0_31 = arith.constant 0 : index
    %218 = vector.load %arg5[%c3_30, %c0_31] : memref<16x128xf32, #tpu.memory_space<vmem>>, vector<1x128xf32>
    tpu.vector_store %arg5[%c3_30, %c0_31], %217 {strides = array<i32>} : memref<16x128xf32, #tpu.memory_space<vmem>>, vector<1x128xf32>,
    %c4_32 = arith.constant 4 : index
    %c0_33 = arith.constant 0 : index
    %219 = vector.load %arg5[%c4_32, %c0_33] : memref<16x128xf32, #tpu.memory_space<vmem>>, vector<1x128xf32>
    tpu.vector_store %arg5[%c4_32, %c0_33], %215 {strides = array<i32>} : memref<16x128xf32, #tpu.memory_space<vmem>>, vector<1x128xf32>,
    %cst_34 = arith.constant 0.000000e+00 : f32
    %220 = arith.subf %cst_34, %6 : f32
    %221 = vector.broadcast %220 : f32 to vector<1x128xf32>
    %222 = arith.mulf %221, %23 : vector<1x128xf32>
    %223 = arith.mulf %222, %57 : vector<1x128xf32>
    %c5_35 = arith.constant 5 : index
    %c0_36 = arith.constant 0 : index
    %224 = vector.load %arg5[%c5_35, %c0_36] : memref<16x128xf32, #tpu.memory_space<vmem>>, vector<1x128xf32>
    tpu.vector_store %arg5[%c5_35, %c0_36], %223 {strides = array<i32>} : memref<16x128xf32, #tpu.memory_space<vmem>>, vector<1x128xf32>,
    %c9_37 = arith.constant 9 : index
    %c0_38 = arith.constant 0 : index
    %225 = vector.load %arg5[%c9_37, %c0_38] : memref<16x128xf32, #tpu.memory_space<vmem>>, vector<1x128xf32>
    tpu.vector_store %arg5[%c9_37, %c0_38], %215 {strides = array<i32>} : memref<16x128xf32, #tpu.memory_space<vmem>>, vector<1x128xf32>,
    %226 = vector.broadcast %7 : f32 to vector<1x128xf32>
    %227 = arith.mulf %226, %56 : vector<1x128xf32>
    %c10_39 = arith.constant 10 : index
    %c0_40 = arith.constant 0 : index
    %228 = vector.load %arg5[%c10_39, %c0_40] : memref<16x128xf32, #tpu.memory_space<vmem>>, vector<1x128xf32>
    tpu.vector_store %arg5[%c10_39, %c0_40], %227 {strides = array<i32>} : memref<16x128xf32, #tpu.memory_space<vmem>>, vector<1x128xf32>,
    %cst_41 = arith.constant 0.000000e+00 : f32
    %229 = arith.subf %cst_41, %7 : f32
    %230 = vector.broadcast %229 : f32 to vector<1x128xf32>
    %231 = arith.mulf %230, %37 : vector<1x128xf32>
    %232 = arith.mulf %231, %57 : vector<1x128xf32>
    %c11_42 = arith.constant 11 : index
    %c0_43 = arith.constant 0 : index
    %233 = vector.load %arg5[%c11_42, %c0_43] : memref<16x128xf32, #tpu.memory_space<vmem>>, vector<1x128xf32>
    tpu.vector_store %arg5[%c11_42, %c0_43], %232 {strides = array<i32>} : memref<16x128xf32, #tpu.memory_space<vmem>>, vector<1x128xf32>,
    %c12_44 = arith.constant 12 : index
    %c0_45 = arith.constant 0 : index
    %234 = vector.load %arg5[%c12_44, %c0_45] : memref<16x128xf32, #tpu.memory_space<vmem>>, vector<1x128xf32>
    tpu.vector_store %arg5[%c12_44, %c0_45], %69 {strides = array<i32>} : memref<16x128xf32, #tpu.memory_space<vmem>>, vector<1x128xf32>,
    %c13_46 = arith.constant 13 : index
    %c0_47 = arith.constant 0 : index
    %235 = vector.load %arg5[%c13_46, %c0_47] : memref<16x128xf32, #tpu.memory_space<vmem>>, vector<1x128xf32>
    tpu.vector_store %arg5[%c13_46, %c0_47], %71 {strides = array<i32>} : memref<16x128xf32, #tpu.memory_space<vmem>>, vector<1x128xf32>,
    %cst_48 = arith.constant 0.000000e+00 : f32
    %236 = vector.broadcast %cst_48 : f32 to vector<2x128xf32>
    %c14_49 = arith.constant 14 : index
    %c0_50 = arith.constant 0 : index
    %237 = vector.load %arg5[%c14_49, %c0_50] : memref<16x128xf32, #tpu.memory_space<vmem>>, vector<2x128xf32>
    tpu.vector_store %arg5[%c14_49, %c0_50], %236 {strides = array<i32>} : memref<16x128xf32, #tpu.memory_space<vmem>>, vector<2x128xf32>,
    %c0_51 = arith.constant 0 : index
    %c0_52 = arith.constant 0 : index
    %238 = vector.load %arg5[%c0_51, %c0_52] : memref<16x128xf32, #tpu.memory_space<vmem>>, vector<16x128xf32>
    %cst_53 = arith.constant dense<0.000000e+00> : vector<16x16xf32>
    %239 = tpu.matmul %238, %238, %cst_53 {dimension_numbers = #tpu.dot_dimension_numbers<[1], [1], [0], [0], [0, 0, 1, 0], [], []>} : vector<16x128xf32>, vector<16x128xf32>, vector<16x16xf32> -> vector<16x16xf32>
    %c0_54 = arith.constant 0 : index
    %c0_55 = arith.constant 0 : index
    %c0_56 = arith.constant 0 : index
    %240 = vector.load %arg4[%c0_54, %c0_55, %c0_56] : memref<1x16x16xf32, #tpu.memory_space<vmem>>, vector<1x16x16xf32>
    %241 = vector.shape_cast %240 : vector<1x16x16xf32> to vector<16x16xf32>
    %242 = vector.shape_cast %239 : vector<16x16xf32> to vector<1x16x16xf32>
    tpu.vector_store %arg4[%c0_54, %c0_55, %c0_56], %242 {strides = array<i32>} : memref<1x16x16xf32, #tpu.memory_space<vmem>>, vector<1x16x16xf32>,
    return
  }
  func.func @transform_0(%arg0: i32, %arg1: memref<43xf32, #tpu.memory_space<smem>>) -> (i32, i32) {
    %c0_i32 = arith.constant 0 : i32
    %c0_i32_0 = arith.constant 0 : i32
    return %c0_i32, %arg0 : i32, i32
  }
  func.func @transform_1(%arg0: i32, %arg1: memref<43xf32, #tpu.memory_space<smem>>) -> (i32, i32) {
    %c0_i32 = arith.constant 0 : i32
    %c0_i32_0 = arith.constant 0 : i32
    return %c0_i32, %arg0 : i32, i32
  }
  func.func @transform_2(%arg0: i32, %arg1: memref<43xf32, #tpu.memory_space<smem>>) -> (i32, i32, i32) {
    %c0_i32 = arith.constant 0 : i32
    %c0_i32_0 = arith.constant 0 : i32
    %c0_i32_1 = arith.constant 0 : i32
    return %arg0, %c0_i32, %c0_i32_0 : i32, i32, i32
  }
}

</mosaic_0001>

<llo_original>
// kernel: tpu_custom_call.1
$region0: #{tpu_custom_call.1}
  #allocation0 [shape = 'u32[]', space=smem, size = 0x4, offset = 0x4, fixed_abs, tag = 'smem constant byte address 0x4 - core index']
  #allocation1 [shape = 'u32[144,128]{1,0:T(1,128)}', space=vmem, size = 0x12000, scoped, tag = 'internal scratch']
  #allocation2 [shape = 'f32[16,128]{1,0:T(8,128)}', space=vmem, size = 0x2000, scoped, tag = 'scratch operand']
  #allocation3 [shape = 's32[1]{0}', space=sflag, size = 0x4, scoped, tag = 'scoped memory for tpu_custom_call.1']
  #allocation4 [shape = 'u8[512]{0}', space=smem, size = 0x200, scoped, tag = 'prefetched SMEM operand 0']
  %s0 = inlined_call_operand.hbm [shape: f32[43], index: 0, kind: input, shape index: {}]
  %s1 = inlined_call_operand.hbm [shape: f32[8,128], index: 1, kind: input, shape index: {}]
  %s2 = inlined_call_operand.hbm [shape: f32[2,128], index: 2, kind: output, shape index: {0}]
  %s3 = inlined_call_operand.hbm [shape: f32[1,16,16], index: 3, kind: output, shape index: {1}]
  %4 = xla_tuple %s2, %s3
  %s5 = sld [smem:[#allocation0]]
  $region26: #{tpu_custom_call.1} parent=0
    _
  %s7 = ssub.s32 1, %s5
  %s8 = scalar_select 0, %s7, %s5
  %10 = dma.hbm_to_smem %s0, 16, [#allocation4], [#allocation3]
  %11 = dma.done [#allocation3], 16
  %12 = sfence
  $region1: #{tpu_custom_call.1} parent=0
    #allocation5 [shape = 'u8[4096]{0}', space=vmem, size = 0x1000, scoped, tag = 'input window, operand 1, single buffered']
    #allocation6 [shape = 's32[1]{0}', space=sflag, size = 0x4, scoped, tag = 'scoped memory for tpu_custom_call.1']
    #allocation7 [shape = 's32[1]{0}', space=sflag, size = 0x4, scoped, tag = 'scoped memory for tpu_custom_call.1']
    #allocation8 [shape = 'u8[1024]{0}', space=vmem, size = 0x400, scoped, tag = 'output window, operand 0, single buffered']
    #allocation9 [shape = 'u8[8192]{0}', space=vmem, size = 0x2000, scoped, tag = 'output window, operand 1, single buffered']
    #allocation10 [shape = 's32[1]{0}', space=sflag, size = 0x4, scoped, tag = 'scoped memory for tpu_custom_call.1']
    %13 = vsyncpa [#allocation6], 0
    %14 = vsyncpa [#allocation7], 0
    %15 = vsyncpa [#allocation10], 0
    // Predicated region
    $region2: #{tpu_custom_call.1} parent=1 // pred_check
      _
    $region3: #{tpu_custom_call.1} parent=1 // pred_check_branch
      %17 = sbr.rel (0) target = $region5
    $region4: #{tpu_custom_call.1} parent=1 // pred_region
      %s19 = ssub.s32 128, 128
      %20 = vsyncadd [#allocation6], %s19
      %s22 = sshll.u32 [#allocation5], 4
      %s23 = int_to_ptr.vmem [resolvable:$true] %s22
      %25 = dma.hbm_to_vmem [thread:$0]  %s1, 128, %s23, [#allocation6]
    $region5: #{tpu_custom_call.1} parent=1 // pred_fallthru
      _
    // Predicated region
    $region6: #{tpu_custom_call.1} parent=1 // pred_check
      _
    $region7: #{tpu_custom_call.1} parent=1 // pred_check_branch
      %27 = sbr.rel (0) target = $region9
    $region8: #{tpu_custom_call.1} parent=1 // pred_region
      %28 = dma.done [#allocation6], 128
    $region9: #{tpu_custom_call.1} parent=1 // pred_fallthru
      _
    %v29 = vld [vmem:[#allocation5] sm:$0x1]
    %v30 = vld [vmem:[#allocation5 + $0x1] sm:$0x1]
    %v31 = vld [vmem:[#allocation5 + $0x2] sm:$0x1]
    %v32 = vld [vmem:[#allocation5 + $0x3] sm:$0x1]
    %v33 = vld [vmem:[#allocation5 + $0x4] sm:$0x1]
    %v34 = vld [vmem:[#allocation5 + $0x5] sm:$0x1]
    %s35 = sld [smem:[#allocation4 + $0x27]]
    %s36 = sld [smem:[#allocation4 + $0x28]]
    %s37 = sld [smem:[#allocation4 + $0x29]]
    %s38 = sld [smem:[#allocation4 + $0x2a]]
    %s39 = sld [smem:[#allocation4]]
    %v40 = vstv %s39
    %v41 = vmul.f32 %v40, %v29
    %s42 = sld [smem:[#allocation4 + $0x1]]
    %v43 = vstv %s42
    %v44 = vmul.f32 %v43, %v30
    %v45 = vadd.f32 %v41, %v44
    %s46 = sld [smem:[#allocation4 + $0x2]]
    %v47 = vstv %s46
    %v48 = vmul.f32 %v47, %v31
    %v49 = vadd.f32 %v45, %v48
    %s50 = sld [smem:[#allocation4 + $0x24]]
    %v51 = vstv %s50
    %v52 = vadd.f32 %v49, %v51
    %s53 = sld [smem:[#allocation4 + $0x3]]
    %v54 = vstv %s53
    %v55 = vmul.f32 %v54, %v29
    %s56 = sld [smem:[#allocation4 + $0x4]]
    %v57 = vstv %s56
    %v58 = vmul.f32 %v57, %v30
    %v59 = vadd.f32 %v55, %v58
    %s60 = sld [smem:[#allocation4 + $0x5]]
    %v61 = vstv %s60
    %v62 = vmul.f32 %v61, %v31
    %v63 = vadd.f32 %v59, %v62
    %s64 = sld [smem:[#allocation4 + $0x25]]
    %v65 = vstv %s64
    %v66 = vadd.f32 %v63, %v65
    %s67 = sld [smem:[#allocation4 + $0x6]]
    %v68 = vstv %s67
    %v69 = vmul.f32 %v68, %v29
    %s70 = sld [smem:[#allocation4 + $0x7]]
    %v71 = vstv %s70
    %v72 = vmul.f32 %v71, %v30
    %v73 = vadd.f32 %v69, %v72
    %s74 = sld [smem:[#allocation4 + $0x8]]
    %v75 = vstv %s74
    %v76 = vmul.f32 %v75, %v31
    %v77 = vadd.f32 %v73, %v76
    %s78 = sld [smem:[#allocation4 + $0x26]]
    %v79 = vstv %s78
    %v80 = vadd.f32 %v77, %v79
    %vm81 = vcmp.gt.f32.partialorder %v34, 0.0
    %v82 = vsel %vm81, %v80, 1.0
    %v83 = vrcp.pop %v82
    %v84 = vmul.f32 %v34, %v83
    %v85 = vmul.f32 %v84, %v84
    %v86 = vstv %s35
    %v87 = vmul.f32 %v86, %v52
    %v88 = vmul.f32 %v87, %v84
    %v89 = vstv %s37
    %v90 = vadd.f32 %v88, %v89
    %v91 = vstv %s36
    %v92 = vmul.f32 %v91, %v66
    %v93 = vmul.f32 %v92, %v84
    %v94 = vstv %s38
    %v95 = vadd.f32 %v93, %v94
    %v96 = vsub.f32 %v90, %v32
    %v97 = vmul.f32 %v96, %v34
    %v98 = vsub.f32 %v95, %v33
    %v99 = vmul.f32 %v98, %v34
    %100 = vst [vmem:[#allocation8] sm:$0x1] %v97
    %101 = vst [vmem:[#allocation8 + $0x1] sm:$0x1] %v99
    %s102 = sld [smem:[#allocation4 + $0x9]]
    %v103 = vstv %s102
    %v104 = vmul.f32 %v103, %v29
    %s105 = sld [smem:[#allocation4 + $0xa]]
    %v106 = vstv %s105
    %v107 = vmul.f32 %v106, %v30
    %v108 = vadd.f32 %v104, %v107
    %s109 = sld [smem:[#allocation4 + $0xb]]
    %v110 = vstv %s109
    %v111 = vmul.f32 %v110, %v31
    %v112 = vadd.f32 %v108, %v111
    %s113 = sld [smem:[#allocation4 + $0xc]]
    %v114 = vstv %s113
    %v115 = vmul.f32 %v114, %v29
    %s116 = sld [smem:[#allocation4 + $0xd]]
    %v117 = vstv %s116
    %v118 = vmul.f32 %v117, %v30
    %v119 = vadd.f32 %v115, %v118
    %s120 = sld [smem:[#allocation4 + $0xe]]
    %v121 = vstv %s120
    %v122 = vmul.f32 %v121, %v31
    %v123 = vadd.f32 %v119, %v122
    %s124 = sld [smem:[#allocation4 + $0xf]]
    %v125 = vstv %s124
    %v126 = vmul.f32 %v125, %v29
    %s127 = sld [smem:[#allocation4 + $0x10]]
    %v128 = vstv %s127
    %v129 = vmul.f32 %v128, %v30
    %v130 = vadd.f32 %v126, %v129
    %s131 = sld [smem:[#allocation4 + $0x11]]
    %v132 = vstv %s131
    %v133 = vmul.f32 %v132, %v31
    %v134 = vadd.f32 %v130, %v133
    %v135 = vmul.f32 %v112, %v84
    %v136 = vmul.f32 %v52, %v134
    %v137 = vmul.f32 %v136, %v85
    %v138 = vsub.f32 %v135, %v137
    %v139 = vmul.f32 %v86, %v138
    %140 = vst [vmem:[#allocation2] sm:$0x1] %v139
    %v141 = vmul.f32 %v123, %v84
    %v142 = vmul.f32 %v66, %v134
    %v143 = vmul.f32 %v142, %v85
    %v144 = vsub.f32 %v141, %v143
    %v145 = vmul.f32 %v91, %v144
    %146 = vst [vmem:[#allocation2 + $0x6] sm:$0x1] %v145
    %s147 = sld [smem:[#allocation4 + $0x12]]
    %v148 = vstv %s147
    %v149 = vmul.f32 %v148, %v29
    %s150 = sld [smem:[#allocation4 + $0x13]]
    %v151 = vstv %s150
    %v152 = vmul.f32 %v151, %v30
    %v153 = vadd.f32 %v149, %v152
    %s154 = sld [smem:[#allocation4 + $0x14]]
    %v155 = vstv %s154
    %v156 = vmul.f32 %v155, %v31
    %v157 = vadd.f32 %v153, %v156
    %s158 = sld [smem:[#allocation4 + $0x15]]
    %v159 = vstv %s158
    %v160 = vmul.f32 %v159, %v29
    %s161 = sld [smem:[#allocation4 + $0x16]]
    %v162 = vstv %s161
    %v163 = vmul.f32 %v162, %v30
    %v164 = vadd.f32 %v160, %v163
    %s165 = sld [smem:[#allocation4 + $0x17]]
    %v166 = vstv %s165
    %v167 = vmul.f32 %v166, %v31
    %v168 = vadd.f32 %v164, %v167
    %s169 = sld [smem:[#allocation4 + $0x18]]
    %v170 = vstv %s169
    %v171 = vmul.f32 %v170, %v29
    %s172 = sld [smem:[#allocation4 + $0x19]]
    %v173 = vstv %s172
    %v174 = vmul.f32 %v173, %v30
    %v175 = vadd.f32 %v171, %v174
    %s176 = sld [smem:[#allocation4 + $0x1a]]
    %v177 = vstv %s176
    %v178 = vmul.f32 %v177, %v31
    %v179 = vadd.f32 %v175, %v178
    %v180 = vmul.f32 %v157, %v84
    %v181 = vmul.f32 %v52, %v179
    %v182 = vmul.f32 %v181, %v85
    %v183 = vsub.f32 %v180, %v182
    %v184 = vmul.f32 %v86, %v183
    %185 = vst [vmem:[#allocation2 + $0x1] sm:$0x1] %v184
    %v186 = vmul.f32 %v168, %v84
    %v187 = vmul.f32 %v66, %v179
    %v188 = vmul.f32 %v187, %v85
    %v189 = vsub.f32 %v186, %v188
    %v190 = vmul.f32 %v91, %v189
    %191 = vst [vmem:[#allocation2 + $0x7] sm:$0x1] %v190
    %s192 = sld [smem:[#allocation4 + $0x1b]]
    %v193 = vstv %s192
    %v194 = vmul.f32 %v193, %v29
    %s195 = sld [smem:[#allocation4 + $0x1c]]
    %v196 = vstv %s195
    %v197 = vmul.f32 %v196, %v30
    %v198 = vadd.f32 %v194, %v197
    %s199 = sld [smem:[#allocation4 + $0x1d]]
    %v200 = vstv %s199
    %v201 = vmul.f32 %v200, %v31
    %v202 = vadd.f32 %v198, %v201
    %s203 = sld [smem:[#allocation4 + $0x1e]]
    %v204 = vstv %s203
    %v205 = vmul.f32 %v204, %v29
    %s206 = sld [smem:[#allocation4 + $0x1f]]
    %v207 = vstv %s206
    %v208 = vmul.f32 %v207, %v30
    %v209 = vadd.f32 %v205, %v208
    %s210 = sld [smem:[#allocation4 + $0x20]]
    %v211 = vstv %s210
    %v212 = vmul.f32 %v211, %v31
    %v213 = vadd.f32 %v209, %v212
    %s214 = sld [smem:[#allocation4 + $0x21]]
    %v215 = vstv %s214
    %v216 = vmul.f32 %v215, %v29
    %s217 = sld [smem:[#allocation4 + $0x22]]
    %v218 = vstv %s217
    %v219 = vmul.f32 %v218, %v30
    %v220 = vadd.f32 %v216, %v219
    %s221 = sld [smem:[#allocation4 + $0x23]]
    %v222 = vstv %s221
    %v223 = vmul.f32 %v222, %v31
    %v224 = vadd.f32 %v220, %v223
    %v225 = vmul.f32 %v202, %v84
    %v226 = vmul.f32 %v52, %v224
    %v227 = vmul.f32 %v226, %v85
    %v228 = vsub.f32 %v225, %v227
    %v229 = vmul.f32 %v86, %v228
    %230 = vst [vmem:[#allocation2 + $0x2] sm:$0x1] %v229
    %v231 = vmul.f32 %v213, %v84
    %v232 = vmul.f32 %v66, %v224
    %v233 = vmul.f32 %v232, %v85
    %v234 = vsub.f32 %v231, %v233
    %v235 = vmul.f32 %v91, %v234
    %236 = vst [vmem:[#allocation2 + $0x8] sm:$0x1] %v235
    %v237 = vmul.f32 %v86, %v84
    %238 = vst [vmem:[#allocation2 + $0x3] sm:$0x1] %v237
    %239 = vst [vmem:[#allocation2 + $0x4] sm:$0x1] 0.0
    %s240 = ssub.f32 0.0, %s35
    %v241 = vstv %s240
    %v242 = vmul.f32 %v241, %v52
    %v243 = vmul.f32 %v242, %v85
    %244 = vst [vmem:[#allocation2 + $0x5] sm:$0x1] %v243
    %245 = vst [vmem:[#allocation2 + $0x9] sm:$0x1] 0.0
    %v246 = vmul.f32 %v91, %v84
    %247 = vst [vmem:[#allocation2 + $0xa] sm:$0x1] %v246
    %s248 = ssub.f32 0.0, %s36
    %v249 = vstv %s248
    %v250 = vmul.f32 %v249, %v66
    %v251 = vmul.f32 %v250, %v85
    %252 = vst [vmem:[#allocation2 + $0xb] sm:$0x1] %v251
    %253 = vst [vmem:[#allocation2 + $0xc] sm:$0x1] %v97
    %254 = vst [vmem:[#allocation2 + $0xd] sm:$0x1] %v99
    %255 = vst [vmem:[#allocation2 + $0xe] sm:$0x3] 0.0
    %v256 = vld [vmem:[#allocation2] sm:$0xff]
    %v257 = vld [vmem:[#allocation2 + $0x8] sm:$0xff]
    %258 = vmatprep.subr.mxu0 0.0
    %259 = vmatpush1.xpose.msra.mxu0 0.0
    %260 = vmatprep.subr.mxu0 0.0
    %261 = vmatpush1.xpose.msra.mxu0 0.0
    %262 = vmatprep.subr.mxu0 0.0
    %263 = vmatpush1.xpose.msra.mxu0 0.0
    %264 = vmatprep.subr.mxu0 0.0
    %265 = vmatpush1.xpose.msra.mxu0 0.0
    %266 = vmatprep.subr.mxu0 0.0
    %267 = vmatpush1.xpose.msra.mxu0 0.0
    %268 = vmatprep.subr.mxu0 0.0
    %269 = vmatpush1.xpose.msra.mxu0 0.0
    %270 = vmatprep.subr.mxu0 0.0
    %271 = vmatpush1.xpose.msra.mxu0 0.0
    %272 = vmatprep.subr.mxu0 0.0
    %273 = vmatpush1.xpose.msra.mxu0 0.0
    %274 = vmatprep.subr.mxu0 0.0
    %275 = vmatpush1.xpose.msra.mxu0 0.0
    %276 = vmatprep.subr.mxu0 0.0
    %277 = vmatpush1.xpose.msra.mxu0 0.0
    %278 = vmatprep.subr.mxu0 0.0
    %279 = vmatpush1.xpose.msra.mxu0 0.0
    %280 = vmatprep.subr.mxu0 0.0
    %281 = vmatpush1.xpose.msra.mxu0 0.0
    %282 = vmatprep.subr.mxu0 0.0
    %283 = vmatpush1.xpose.msra.mxu0 0.0
    %284 = vmatprep.subr.mxu0 0.0
    %285 = vmatpush1.xpose.msra.mxu0 0.0
    %286 = vmatprep.subr.mxu0 0.0
    %287 = vmatpush1.xpose.msra.mxu0 %v257
    %288 = vmatprep.subr.mxu0 0.0
    %289 = vmatpush1.xpose.msra.mxu0 %v256
    %290 = vmatprep.subr.mxu0 0.0
    %291 = vmatpush2.xpose.msra.mxu0 0.0
    %292 = vmatprep.subr.mxu0 0.0
    %293 = vmatpush2.xpose.msra.mxu0 0.0
    %294 = vmatprep.subr.mxu0 0.0
    %295 = vmatpush2.xpose.msra.mxu0 0.0
    %296 = vmatprep.subr.mxu0 0.0
    %297 = vmatpush2.xpose.msra.mxu0 0.0
    %298 = vmatprep.subr.mxu0 0.0
    %299 = vmatpush2.xpose.msra.mxu0 0.0
    %300 = vmatprep.subr.mxu0 0.0
    %301 = vmatpush2.xpose.msra.mxu0 0.0
    %302 = vmatprep.subr.mxu0 0.0
    %303 = vmatpush2.xpose.msra.mxu0 0.0
    %304 = vmatprep.subr.mxu0 0.0
    %305 = vmatpush2.xpose.msra.mxu0 0.0
    %306 = vmatprep.subr.mxu0 0.0
    %307 = vmatpush2.xpose.msra.mxu0 0.0
    %308 = vmatprep.subr.mxu0 0.0
    %309 = vmatpush2.xpose.msra.mxu0 0.0
    %310 = vmatprep.subr.mxu0 0.0
    %311 = vmatpush2.xpose.msra.mxu0 0.0
    %312 = vmatprep.subr.mxu0 0.0
    %313 = vmatpush2.xpose.msra.mxu0 0.0
    %314 = vmatprep.subr.mxu0 0.0
    %315 = vmatpush2.xpose.msra.mxu0 0.0
    %316 = vmatprep.subr.mxu0 0.0
    %317 = vmatpush2.xpose.msra.mxu0 0.0
    %318 = vmatprep.subr.mxu0 0.0
    %319 = vmatpush2.xpose.msra.mxu0 0.0
    %320 = vmatprep.subr.mxu0 0.0
    %321 = vmatpush2.xpose.msra.mxu0 0.0
    %322 = vmatprep.mubr.f32.mxu0 0.0
    %323 = vmatmul.mubr.f32.gmra.mxu0 %v256
    %v324 = vpop.f32.mrf.mxu0
    %v325 = vadd.f32 0.0, %v324
    %v326 = vpop.f32.mrf.mxu0
    %327 = vmatprep.mubr.f32.mxu0 0.0
    %328 = vmatmul.mubr.f32.gmra.mxu0 %v257
    %v329 = vpop.f32.mrf.mxu0
    %v330 = vadd.f32 0.0, %v329
    %v331 = vpop.f32.mrf.mxu0
    %332 = vdwg.mxu0
    %vm333 = vcmask 130048
    %334 = vst.msk [vmem:[#allocation9] sm:$0xff] %vm333, %v325
    %335 = vst.msk [vmem:[#allocation9 + $0x8] sm:$0xff] %vm333, %v330
    // Predicated region
    $region10: #{tpu_custom_call.1} parent=1 // pred_check
      _
    $region11: #{tpu_custom_call.1} parent=1 // pred_check_branch
      %337 = sbr.rel (0) target = $region13
    $region12: #{tpu_custom_call.1} parent=1 // pred_region
      %s339 = ssub.s32 32, 32
      %340 = vsyncadd [#allocation7], %s339
      %s342 = sshll.u32 [#allocation8], 4
      %s343 = int_to_ptr.vmem [resolvable:$true] %s342
      %345 = dma.vmem_to_hbm [thread:$0]  %s343, 32, %s2, [#allocation7]
    $region13: #{tpu_custom_call.1} parent=1 // pred_fallthru
      _
    // Predicated region
    $region14: #{tpu_custom_call.1} parent=1 // pred_check
      _
    $region15: #{tpu_custom_call.1} parent=1 // pred_check_branch
      %347 = sbr.rel (0) target = $region17
    $region16: #{tpu_custom_call.1} parent=1 // pred_region
      %s349 = ssub.s32 256, 256
      %350 = vsyncadd [#allocation10], %s349
      %s351 = sshll.u32 [#allocation9], 4
      %s352 = int_to_ptr.vmem [resolvable:$true] %s351
      %357 = dma.vmem_to_hbm [thread:$0]  %s352, 256, %s3, [#allocation10], 128, 128, 8
    $region17: #{tpu_custom_call.1} parent=1 // pred_fallthru
      _
    // Predicated region
    $region18: #{tpu_custom_call.1} parent=1 // pred_check
      _
    $region19: #{tpu_custom_call.1} parent=1 // pred_check_branch
      %359 = sbr.rel (0) target = $region21
    $region20: #{tpu_custom_call.1} parent=1 // pred_region
      %360 = dma.done [#allocation7], 32
    $region21: #{tpu_custom_call.1} parent=1 // pred_fallthru
      _
    // Predicated region
    $region22: #{tpu_custom_call.1} parent=1 // pred_check
      _
    $region23: #{tpu_custom_call.1} parent=1 // pred_check_branch
      %362 = sbr.rel (0) target = $region25
    $region24: #{tpu_custom_call.1} parent=1 // pred_region
      %363 = dma.done [#allocation10], 256
    $region25: #{tpu_custom_call.1} parent=1 // pred_fallthru
      _
    %364 = vsyncpa [#allocation6], 1
    %365 = vsyncpa [#allocation7], 1
    %366 = vsyncpa [#allocation10], 1

</llo_original>
